<compile_context>
chip_gen: v6e
topology: v6e:2x2x1
jax: 0.10.0
libtpu: 0.0.40
codegen_flags: <defaults>
</compile_context>

<pallas_src>
import jax
import jax.numpy as jnp
from jax.experimental import pallas as pl
from jax.experimental.pallas import tpu as pltpu

LIN = 10
LOUT = 1
HL = int(LIN * 2 / 3 + LOUT)  # = 7


def _round_up(n, m):
    return ((n + m - 1) // m) * m


def mlp_kernel(x_ref, w1_ref, b1_ref, w2_ref, b2_ref, w3_ref, b3_ref, o_ref):
    # Feature-major: x_ref is (LIN, TB) with the batch on the 128-lane axis.
    # Whole forward pass per tile: 3 matmuls + bias adds + 2 ReLUs.
    x = x_ref[...]

    h = jnp.dot(w1_ref[...], x, preferred_element_type=jnp.float32) + b1_ref[...]
    h = jnp.maximum(h, 0.0)

    h = jnp.dot(w2_ref[...], h, preferred_element_type=jnp.float32) + b2_ref[...]
    h = jnp.maximum(h, 0.0)

    o_ref[...] = (
        jnp.dot(w3_ref[...], h, preferred_element_type=jnp.float32) + b3_ref[...]
    )


def net_forward(x, params, *, tb=8192):
    """Forward pass of Net.  x: (B, LIN) float32  ->  (B, LOUT) float32."""
    B = x.shape[0]
    # Lane-axis tile: multiple of 128, large enough to amortize the ~0.35 us
    # per-grid-step overhead, clamped so tiny batches still work.
    tb = max(128, min(int(tb), _round_up(B, 128)))
    Bp = _round_up(B, tb)
    grid = (Bp // tb,)

    # Feature-major: transpose so batch is the (fast) lane axis; pad batch to
    # a tile multiple (padding flows through as bias-only garbage, sliced off).
    xt = jnp.transpose(x.astype(jnp.float32))            # (LIN, B)
    if Bp != B:
        xt = jnp.pad(xt, ((0, 0), (0, Bp - B)))

    w1, b1 = params["w1"], params["b1"]    # (HL, LIN), (HL, 1)
    w2, b2 = params["w2"], params["b2"]    # (HL, HL),  (HL, 1)
    w3, b3 = params["w3"], params["b3"]    # (LOUT, HL),(LOUT, 1)

    x_spec = pl.BlockSpec((LIN, tb), lambda i: (0, i))
    o_spec = pl.BlockSpec((LOUT, tb), lambda i: (0, i))

    def const_spec(shape):
        # Parameters: same block every grid step -> stay resident in VMEM.
        return pl.BlockSpec(shape, lambda i: (0, 0))

    out_t = pl.pallas_call(
        mlp_kernel,
        out_shape=jax.ShapeDtypeStruct((LOUT, Bp), jnp.float32),
        grid=grid,
        in_specs=[
            x_spec,
            const_spec((HL, LIN)), const_spec((HL, 1)),
            const_spec((HL, HL)), const_spec((HL, 1)),
            const_spec((LOUT, HL)), const_spec((LOUT, 1)),
        ],
        out_specs=o_spec,
        compiler_params=pltpu.CompilerParams(
            dimension_semantics=("parallel",),
        ),
    )(xt, w1, b1, w2, b2, w3, b3)

    return jnp.transpose(out_t[:, :B])                    # (B, LOUT)


def init_params(key):
    """Deterministic init mimicking PyTorch Linear default (uniform +-1/sqrt(fan_in))."""
    keys = jax.random.split(key, 6)

    def linear(kw, kb, fan_in, fan_out):
        bound = 1.0 / jnp.sqrt(jnp.float32(fan_in))
        # Stored feature-major: weight (out, in), bias (out, 1) -> kernel does W @ X + b.
        w = jax.random.uniform(kw, (fan_out, fan_in), jnp.float32, -bound, bound)
        b = jax.random.uniform(kb, (fan_out, 1), jnp.float32, -bound, bound)
        return w, b

    w1, b1 = linear(keys[0], keys[1], LIN, HL)
    w2, b2 = linear(keys[2], keys[3], HL, HL)
    w3, b3 = linear(keys[4], keys[5], HL, LOUT)
    return {"w1": w1, "b1": b1, "w2": w2, "b2": b2, "w3": w3, "b3": b3}


def net_forward_ref(x, p):
    h = jnp.maximum(x @ p["w1"].T + p["b1"].T, 0.0)
    h = jnp.maximum(h @ p["w2"].T + p["b2"].T, 0.0)
    return h @ p["w3"].T + p["b3"].T


if __name__ == "__main__":
    key = jax.random.PRNGKey(0)
    k_params, k_x = jax.random.split(key)

    params = init_params(k_params)

    # Small test shapes; B=384 with tb=256 exercises both the grid (2 steps)
    # and the batch-padding path (Bp=512).
    B = 384
    x = jax.random.normal(k_x, (B, LIN), jnp.float32)

    out = net_forward(x, params, tb=256)
    out = jax.block_until_ready(out)

    ref = net_forward_ref(x, params)
    assert out.shape == (B, LOUT), out.shape
    assert jnp.allclose(out, ref, atol=1e-5, rtol=1e-5), (
        jnp.max(jnp.abs(out - ref)),
    )

    print("KERNEL_OK")
</pallas_src>

<mosaic_0001>
module attributes {stable_mosaic.version = 11 : i64} {
  func.func @mlp_kernel(%arg0: i32, %arg1: memref<10x256xf32, #tpu.memory_space<vmem>>, %arg2: memref<7x10xf32, #tpu.memory_space<vmem>>, %arg3: memref<7x1xf32, #tpu.memory_space<vmem>>, %arg4: memref<7x7xf32, #tpu.memory_space<vmem>>, %arg5: memref<7x1xf32, #tpu.memory_space<vmem>>, %arg6: memref<1x7xf32, #tpu.memory_space<vmem>>, %arg7: memref<1x1xf32, #tpu.memory_space<vmem>>, %arg8: memref<1x256xf32, #tpu.memory_space<vmem>>) attributes {dimension_semantics = [#tpu.dimension_semantics<parallel>], iteration_bounds = array<i64: 2>, scalar_prefetch = 0 : i64, scratch_operands = 0 : i64, tpu.core_type = #tpu.core_type<tc>, window_params = [{transform_indices = @transform_0, window_bounds = array<i64: 10, 256>}, {pipeline_mode = #tpu.pipeline_mode<synchronous>, transform_indices = @transform_1, window_bounds = array<i64: 7, 10>}, {pipeline_mode = #tpu.pipeline_mode<synchronous>, transform_indices = @transform_2, window_bounds = array<i64: 7, 1>}, {pipeline_mode = #tpu.pipeline_mode<synchronous>, transform_indices = @transform_3, window_bounds = array<i64: 7, 7>}, {pipeline_mode = #tpu.pipeline_mode<synchronous>, transform_indices = @transform_4, window_bounds = array<i64: 7, 1>}, {pipeline_mode = #tpu.pipeline_mode<synchronous>, transform_indices = @transform_5, window_bounds = array<i64: 1, 7>}, {pipeline_mode = #tpu.pipeline_mode<synchronous>, transform_indices = @transform_6, window_bounds = array<i64: 1, 1>}, {transform_indices = @transform_7, window_bounds = array<i64: 1, 256>}]} {
    %c0 = arith.constant 0 : index
    %c0_0 = arith.constant 0 : index
    %0 = vector.load %arg1[%c0, %c0_0] : memref<10x256xf32, #tpu.memory_space<vmem>>, vector<10x256xf32>
    %c0_1 = arith.constant 0 : index
    %c0_2 = arith.constant 0 : index
    %1 = vector.load %arg2[%c0_1, %c0_2] : memref<7x10xf32, #tpu.memory_space<vmem>>, vector<7x10xf32>
    %cst = arith.constant dense<0.000000e+00> : vector<7x256xf32>
    %2 = tpu.matmul %1, %0, %cst {dimension_numbers = #tpu.dot_dimension_numbers<[1], [0], [0], [1], [0, 0, 1, 1], [], []>} : vector<7x10xf32>, vector<10x256xf32>, vector<7x256xf32> -> vector<7x256xf32>
    %c0_3 = arith.constant 0 : index
    %c0_4 = arith.constant 0 : index
    %3 = vector.load %arg3[%c0_3, %c0_4] : memref<7x1xf32, #tpu.memory_space<vmem>>, vector<7x1xf32>
    %4 = vector.broadcast %3 : vector<7x1xf32> to vector<7x256xf32>
    %5 = arith.addf %2, %4 : vector<7x256xf32>
    %cst_5 = arith.constant 0.000000e+00 : f32
    %6 = vector.broadcast %cst_5 : f32 to vector<7x256xf32>
    %7 = arith.maximumf %5, %6 : vector<7x256xf32>
    %c0_6 = arith.constant 0 : index
    %c0_7 = arith.constant 0 : index
    %8 = vector.load %arg4[%c0_6, %c0_7] : memref<7x7xf32, #tpu.memory_space<vmem>>, vector<7x7xf32>
    %cst_8 = arith.constant dense<0.000000e+00> : vector<7x256xf32>
    %9 = tpu.matmul %8, %7, %cst_8 {dimension_numbers = #tpu.dot_dimension_numbers<[1], [0], [0], [1], [0, 0, 1, 1], [], []>} : vector<7x7xf32>, vector<7x256xf32>, vector<7x256xf32> -> vector<7x256xf32>
    %c0_9 = arith.constant 0 : index
    %c0_10 = arith.constant 0 : index
    %10 = vector.load %arg5[%c0_9, %c0_10] : memref<7x1xf32, #tpu.memory_space<vmem>>, vector<7x1xf32>
    %11 = vector.broadcast %10 : vector<7x1xf32> to vector<7x256xf32>
    %12 = arith.addf %9, %11 : vector<7x256xf32>
    %cst_11 = arith.constant 0.000000e+00 : f32
    %13 = vector.broadcast %cst_11 : f32 to vector<7x256xf32>
    %14 = arith.maximumf %12, %13 : vector<7x256xf32>
    %c0_12 = arith.constant 0 : index
    %c0_13 = arith.constant 0 : index
    %15 = vector.load %arg6[%c0_12, %c0_13] : memref<1x7xf32, #tpu.memory_space<vmem>>, vector<1x7xf32>
    %cst_14 = arith.constant dense<0.000000e+00> : vector<1x256xf32>
    %16 = tpu.matmul %15, %14, %cst_14 {dimension_numbers = #tpu.dot_dimension_numbers<[1], [0], [0], [1], [0, 0, 1, 1], [], []>} : vector<1x7xf32>, vector<7x256xf32>, vector<1x256xf32> -> vector<1x256xf32>
    %c0_15 = arith.constant 0 : index
    %c0_16 = arith.constant 0 : index
    %17 = vector.load %arg7[%c0_15, %c0_16] : memref<1x1xf32, #tpu.memory_space<vmem>>, vector<1x1xf32>
    %18 = vector.broadcast %17 : vector<1x1xf32> to vector<1x256xf32>
    %19 = arith.addf %16, %18 : vector<1x256xf32>
    %c0_17 = arith.constant 0 : index
    %c0_18 = arith.constant 0 : index
    %20 = vector.load %arg8[%c0_17, %c0_18] : memref<1x256xf32, #tpu.memory_space<vmem>>, vector<1x256xf32>
    tpu.vector_store %arg8[%c0_17, %c0_18], %19 {strides = array<i32>} : memref<1x256xf32, #tpu.memory_space<vmem>>, vector<1x256xf32>,
    return
  }
  func.func @transform_0(%arg0: i32) -> (i32, i32) {
    %c0_i32 = arith.constant 0 : i32
    %c0_i32_0 = arith.constant 0 : i32
    return %c0_i32, %arg0 : i32, i32
  }
  func.func @transform_1(%arg0: i32) -> (i32, i32) {
    %c0_i32 = arith.constant 0 : i32
    %c0_i32_0 = arith.constant 0 : i32
    %c0_i32_1 = arith.constant 0 : i32
    return %c0_i32, %c0_i32_0 : i32, i32
  }
  func.func @transform_2(%arg0: i32) -> (i32, i32) {
    %c0_i32 = arith.constant 0 : i32
    %c0_i32_0 = arith.constant 0 : i32
    %c0_i32_1 = arith.constant 0 : i32
    return %c0_i32, %c0_i32_0 : i32, i32
  }
  func.func @transform_3(%arg0: i32) -> (i32, i32) {
    %c0_i32 = arith.constant 0 : i32
    %c0_i32_0 = arith.constant 0 : i32
    %c0_i32_1 = arith.constant 0 : i32
    return %c0_i32, %c0_i32_0 : i32, i32
  }
  func.func @transform_4(%arg0: i32) -> (i32, i32) {
    %c0_i32 = arith.constant 0 : i32
    %c0_i32_0 = arith.constant 0 : i32
    %c0_i32_1 = arith.constant 0 : i32
    return %c0_i32, %c0_i32_0 : i32, i32
  }
  func.func @transform_5(%arg0: i32) -> (i32, i32) {
    %c0_i32 = arith.constant 0 : i32
    %c0_i32_0 = arith.constant 0 : i32
    %c0_i32_1 = arith.constant 0 : i32
    return %c0_i32, %c0_i32_0 : i32, i32
  }
  func.func @transform_6(%arg0: i32) -> (i32, i32) {
    %c0_i32 = arith.constant 0 : i32
    %c0_i32_0 = arith.constant 0 : i32
    %c0_i32_1 = arith.constant 0 : i32
    return %c0_i32, %c0_i32_0 : i32, i32
  }
  func.func @transform_7(%arg0: i32) -> (i32, i32) {
    %c0_i32 = arith.constant 0 : i32
    %c0_i32_0 = arith.constant 0 : i32
    return %c0_i32, %arg0 : i32, i32
  }
}

</mosaic_0001>

<llo_original>
// kernel: tpu_custom_call.1
$region0: #{tpu_custom_call.1}
  #allocation0 [shape = 'u32[]', space=smem, size = 0x4, offset = 0x4, fixed_abs, tag = 'smem constant byte address 0x4 - core index']
  #allocation1 [shape = 'u32[144,128]{1,0:T(1,128)}', space=vmem, size = 0x12000, scoped, tag = 'internal scratch']
  #allocation2 [shape = 'f32[1,1]{1,0:T(1,128)S(1)}', space=vmem, size = 0x200, scoped, tag = 'scoped memory for tpu_custom_call.1']
  %s0 = inlined_call_operand.hbm [shape: f32[10,512], index: 0, kind: input, shape index: {}]
  %s1 = inlined_call_operand.vmem [shape: f32[7,10], index: 1, kind: input, shape index: {}]
  %s2 = inlined_call_operand.vmem [shape: f32[7,1], index: 2, kind: input, shape index: {}]
  %s3 = inlined_call_operand.vmem [shape: f32[7,7], index: 3, kind: input, shape index: {}]
  %s4 = inlined_call_operand.vmem [shape: f32[7,1], index: 4, kind: input, shape index: {}]
  %s5 = inlined_call_operand.vmem [shape: f32[1,7], index: 5, kind: input, shape index: {}]
  %s6 = inlined_call_operand.<no memory space> [shape: f32[1,1], index: 6, kind: input, shape index: {}]
  %s7 = inlined_call_operand.hbm [shape: f32[1,512], index: 7, kind: output, shape index: {}]
  %s8 = sld [smem:[#allocation0]]
  $region65: #{tpu_custom_call.1} parent=0
    _
  %s10 = ssub.s32 1, %s8
  %s11 = scalar_select 0, %s10, %s8
  %v12 = vstv %s6
  %13 = vst [vmem:[#allocation2] sm:$0x1] %v12
  $region1: #{tpu_custom_call.1} parent=0
    #allocation3 [shape = 'u8[32768]{0}', space=vmem, size = 0x8000, scoped, tag = 'input window, operand 0']
    #allocation4 [shape = 's32[2]{0}', space=sflag, size = 0x8, scoped, tag = 'scoped memory for tpu_custom_call.1']
    #allocation5 [shape = 's32[2]{0}', space=sflag, size = 0x8, scoped, tag = 'scoped memory for tpu_custom_call.1']
    #allocation6 [shape = 'u8[2048]{0}', space=vmem, size = 0x800, scoped, tag = 'output window, operand 0']
    %14 = vsyncpa [#allocation4], 0
    %s15 = scalar_lea.sflag [#allocation4], 1
    %16 = vsyncpa %s15, 0
    %17 = vsyncpa [#allocation5], 0
    %s18 = scalar_lea.sflag [#allocation5], 1
    %19 = vsyncpa %s18, 0
    loop: start=0, step=1, limit=4
    $region2: #{tpu_custom_call.1} parent=1 // loop_pre_header
      _
    $region3: #{tpu_custom_call.1} parent=1 // loop_header
      %s21 = sphi 0, %s25
      %p22 = scmp.ge.s32.totalorder %s21, 4
      %s31 = sphi 0, %s33
      %s34 = sphi 0, %s31
      %s35 = sphi 0, %s34
      %s51 = sphi 0, %s35
      %s55 = sphi 0, %s55
      %s57 = sphi 0, %s55
      %s58 = sphi 0, %s57
      %s72 = sphi 0, %s58
      %s76 = sphi 0, %s76
      %s78 = sphi 0, %s76
      %s79 = sphi 0, %s78
      %s93 = sphi 0, %s79
      %s97 = sphi 0, %s97
      %s99 = sphi 0, %s97
      %s100 = sphi 0, %s99
      %s114 = sphi 0, %s100
      %s118 = sphi 0, %s118
      %s120 = sphi 0, %s118
      %s121 = sphi 0, %s120
      %s135 = sphi 0, %s121
      %s139 = sphi 0, %s139
      %s141 = sphi 0, %s139
      %s142 = sphi 0, %s141
      %s156 = sphi 0, %s142
      %s160 = sphi 0, %s160
      %s162 = sphi 0, %s160
      %s163 = sphi 0, %s162
      %s177 = sphi 0, %s163
      %s183 = sphi 0, %s185
      %s186 = sphi 0, %s183
      %s187 = sphi 0, %s186
      %s203 = sphi 0, %s187
    $region4: #{tpu_custom_call.1} parent=1 // loop_header_branch
      %24 = sbr.rel (%p22) target = $region8
    $region5: #{tpu_custom_call.1} parent=1 // loop_body
      %s26 = ssub.s32 %s21, 1
      %s27 = ssub.s32 %s21, 2
      %s28 = sadd.s32 %s21, 1
      %s29 = ssub.s32 %s21, %s28
      %p30 = scmp.eq.s32.totalorder %s29, 0
      %s32 = sadd.s32 %s31, 1
      %s33 = scalar_select %p30, %s31, %s32
      %p36 = pneg %p30
      %p37 = scmp.eq.s32.totalorder %s21, 1
      %p38 = por %p36, %p37
      %p39 = scmp.ne.s32.totalorder %s31, %s34
      %p40 = scmp.eq.s32.totalorder %s21, 0
      %p41 = por %p39, %p40
      %p42 = scmp.ne.s32.totalorder %s31, %s34
      %p43 = scmp.eq.s32.totalorder %s26, 1
      %p44 = por %p42, %p43
      %p45 = scmp.ne.s32.totalorder %s34, %s35
      %p46 = scmp.eq.s32.totalorder %s26, 0
      %p47 = por %p45, %p46
      %p48 = scmp.ne.s32.totalorder %s34, %s35
      %p49 = scmp.eq.s32.totalorder %s27, 1
      %p50 = por %p48, %p49
      %p52 = scmp.ne.s32.totalorder %s35, %s51
      %p53 = scmp.eq.s32.totalorder %s27, 0
      %p54 = por %p52, %p53
      %s56 = sadd.s32 %s55, 1
      %p59 = scmp.eq.s32.totalorder %s21, 1
      %p60 = scmp.ne.s32.totalorder %s55, %s57
      %p61 = scmp.eq.s32.totalorder %s21, 0
      %p62 = por %p60, %p61
      %p63 = scmp.ne.s32.totalorder %s55, %s57
      %p64 = scmp.eq.s32.totalorder %s26, 1
      %p65 = por %p63, %p64
      %p66 = scmp.ne.s32.totalorder %s57, %s58
      %p67 = scmp.eq.s32.totalorder %s26, 0
      %p68 = por %p66, %p67
      %p69 = scmp.ne.s32.totalorder %s57, %s58
      %p70 = scmp.eq.s32.totalorder %s27, 1
      %p71 = por %p69, %p70
      %p73 = scmp.ne.s32.totalorder %s58, %s72
      %p74 = scmp.eq.s32.totalorder %s27, 0
      %p75 = por %p73, %p74
      %s77 = sadd.s32 %s76, 1
      %p80 = scmp.eq.s32.totalorder %s21, 1
      %p81 = scmp.ne.s32.totalorder %s76, %s78
      %p82 = scmp.eq.s32.totalorder %s21, 0
      %p83 = por %p81, %p82
      %p84 = scmp.ne.s32.totalorder %s76, %s78
      %p85 = scmp.eq.s32.totalorder %s26, 1
      %p86 = por %p84, %p85
      %p87 = scmp.ne.s32.totalorder %s78, %s79
      %p88 = scmp.eq.s32.totalorder %s26, 0
      %p89 = por %p87, %p88
      %p90 = scmp.ne.s32.totalorder %s78, %s79
      %p91 = scmp.eq.s32.totalorder %s27, 1
      %p92 = por %p90, %p91
      %p94 = scmp.ne.s32.totalorder %s79, %s93
      %p95 = scmp.eq.s32.totalorder %s27, 0
      %p96 = por %p94, %p95
      %s98 = sadd.s32 %s97, 1
      %p101 = scmp.eq.s32.totalorder %s21, 1
      %p102 = scmp.ne.s32.totalorder %s97, %s99
      %p103 = scmp.eq.s32.totalorder %s21, 0
      %p104 = por %p102, %p103
      %p105 = scmp.ne.s32.totalorder %s97, %s99
      %p106 = scmp.eq.s32.totalorder %s26, 1
      %p107 = por %p105, %p106
      %p108 = scmp.ne.s32.totalorder %s99, %s100
      %p109 = scmp.eq.s32.totalorder %s26, 0
      %p110 = por %p108, %p109
      %p111 = scmp.ne.s32.totalorder %s99, %s100
      %p112 = scmp.eq.s32.totalorder %s27, 1
      %p113 = por %p111, %p112
      %p115 = scmp.ne.s32.totalorder %s100, %s114
      %p116 = scmp.eq.s32.totalorder %s27, 0
      %p117 = por %p115, %p116
      %s119 = sadd.s32 %s118, 1
      %p122 = scmp.eq.s32.totalorder %s21, 1
      %p123 = scmp.ne.s32.totalorder %s118, %s120
      %p124 = scmp.eq.s32.totalorder %s21, 0
      %p125 = por %p123, %p124
      %p126 = scmp.ne.s32.totalorder %s118, %s120
      %p127 = scmp.eq.s32.totalorder %s26, 1
      %p128 = por %p126, %p127
      %p129 = scmp.ne.s32.totalorder %s120, %s121
      %p130 = scmp.eq.s32.totalorder %s26, 0
      %p131 = por %p129, %p130
      %p132 = scmp.ne.s32.totalorder %s120, %s121
      %p133 = scmp.eq.s32.totalorder %s27, 1
      %p134 = por %p132, %p133
      %p136 = scmp.ne.s32.totalorder %s121, %s135
      %p137 = scmp.eq.s32.totalorder %s27, 0
      %p138 = por %p136, %p137
      %s140 = sadd.s32 %s139, 1
      %p143 = scmp.eq.s32.totalorder %s21, 1
      %p144 = scmp.ne.s32.totalorder %s139, %s141
      %p145 = scmp.eq.s32.totalorder %s21, 0
      %p146 = por %p144, %p145
      %p147 = scmp.ne.s32.totalorder %s139, %s141
      %p148 = scmp.eq.s32.totalorder %s26, 1
      %p149 = por %p147, %p148
      %p150 = scmp.ne.s32.totalorder %s141, %s142
      %p151 = scmp.eq.s32.totalorder %s26, 0
      %p152 = por %p150, %p151
      %p153 = scmp.ne.s32.totalorder %s141, %s142
      %p154 = scmp.eq.s32.totalorder %s27, 1
      %p155 = por %p153, %p154
      %p157 = scmp.ne.s32.totalorder %s142, %s156
      %p158 = scmp.eq.s32.totalorder %s27, 0
      %p159 = por %p157, %p158
      %s161 = sadd.s32 %s160, 1
      %p164 = scmp.eq.s32.totalorder %s21, 1
      %p165 = scmp.ne.s32.totalorder %s160, %s162
      %p166 = scmp.eq.s32.totalorder %s21, 0
      %p167 = por %p165, %p166
      %p168 = scmp.ne.s32.totalorder %s160, %s162
      %p169 = scmp.eq.s32.totalorder %s26, 1
      %p170 = por %p168, %p169
      %p171 = scmp.ne.s32.totalorder %s162, %s163
      %p172 = scmp.eq.s32.totalorder %s26, 0
      %p173 = por %p171, %p172
      %p174 = scmp.ne.s32.totalorder %s162, %s163
      %p175 = scmp.eq.s32.totalorder %s27, 1
      %p176 = por %p174, %p175
      %p178 = scmp.ne.s32.totalorder %s163, %s177
      %p179 = scmp.eq.s32.totalorder %s27, 0
      %p180 = por %p178, %p179
      %s181 = ssub.s32 %s21, %s28
      %p182 = scmp.eq.s32.totalorder %s181, 0
      %s184 = sadd.s32 %s183, 1
      %s185 = scalar_select %p182, %s183, %s184
      %p188 = pneg %p182
      %p189 = scmp.eq.s32.totalorder %s21, 1
      %p190 = por %p188, %p189
      %p191 = scmp.ne.s32.totalorder %s183, %s186
      %p192 = scmp.eq.s32.totalorder %s21, 0
      %p193 = por %p191, %p192
      %p194 = scmp.ne.s32.totalorder %s183, %s186
      %p195 = scmp.eq.s32.totalorder %s26, 1
      %p196 = por %p194, %p195
      %p197 = scmp.ne.s32.totalorder %s186, %s187
      %p198 = scmp.eq.s32.totalorder %s26, 0
      %p199 = por %p197, %p198
      %p200 = scmp.ne.s32.totalorder %s186, %s187
      %p201 = scmp.eq.s32.totalorder %s27, 1
      %p202 = por %p200, %p201
      %p204 = scmp.ne.s32.totalorder %s187, %s203
      %p205 = scmp.eq.s32.totalorder %s27, 0
      %p206 = por %p204, %p205
      %p207 = scmp.le.s32.totalorder 1, %s21
      %p208 = scmp.lt.s32.totalorder %s21, 3
      %p209 = pnand %p207, %p208
      %p210 = pneg %p209
      // Predicated region
      $region9: #{tpu_custom_call.1} parent=5 // pred_check
        _
      $region10: #{tpu_custom_call.1} parent=5 // pred_check_branch
        %212 = sbr.rel (%p209) target = $region12
      $region11: #{tpu_custom_call.1} parent=5 // pred_region
        %s213 = ssub.s32 %s21, 1
        // Predicated region
        $region13: #{tpu_custom_call.1} parent=11 // pred_check
          %p214 = pneg %p68
        $region14: #{tpu_custom_call.1} parent=11 // pred_check_branch
          %216 = sbr.rel (%p214) target = $region16
        $region15: #{tpu_custom_call.1} parent=11 // pred_region
          _
        $region16: #{tpu_custom_call.1} parent=11 // pred_fallthru
          _
        // Predicated region
        $region17: #{tpu_custom_call.1} parent=11 // pred_check
          %p217 = pneg %p89
        $region18: #{tpu_custom_call.1} parent=11 // pred_check_branch
          %219 = sbr.rel (%p217) target = $region20
        $region19: #{tpu_custom_call.1} parent=11 // pred_region
          _
        $region20: #{tpu_custom_call.1} parent=11 // pred_fallthru
          _
        // Predicated region
        $region21: #{tpu_custom_call.1} parent=11 // pred_check
          %p220 = pneg %p110
        $region22: #{tpu_custom_call.1} parent=11 // pred_check_branch
          %222 = sbr.rel (%p220) target = $region24
        $region23: #{tpu_custom_call.1} parent=11 // pred_region
          _
        $region24: #{tpu_custom_call.1} parent=11 // pred_fallthru
          _
        // Predicated region
        $region25: #{tpu_custom_call.1} parent=11 // pred_check
          %p223 = pneg %p131
        $region26: #{tpu_custom_call.1} parent=11 // pred_check_branch
          %225 = sbr.rel (%p223) target = $region28
        $region27: #{tpu_custom_call.1} parent=11 // pred_region
          _
        $region28: #{tpu_custom_call.1} parent=11 // pred_fallthru
          _
        // Predicated region
        $region29: #{tpu_custom_call.1} parent=11 // pred_check
          %p226 = pneg %p152
        $region30: #{tpu_custom_call.1} parent=11 // pred_check_branch
          %228 = sbr.rel (%p226) target = $region32
        $region31: #{tpu_custom_call.1} parent=11 // pred_region
          _
        $region32: #{tpu_custom_call.1} parent=11 // pred_fallthru
          _
        // Predicated region
        $region33: #{tpu_custom_call.1} parent=11 // pred_check
          %p229 = pneg %p173
        $region34: #{tpu_custom_call.1} parent=11 // pred_check_branch
          %231 = sbr.rel (%p229) target = $region36
        $region35: #{tpu_custom_call.1} parent=11 // pred_region
          _
        $region36: #{tpu_custom_call.1} parent=11 // pred_fallthru
          _
      $region12: #{tpu_custom_call.1} parent=5 // pred_fallthru
        _
      %p232 = scmp.lt.s32.totalorder %s21, 2
      // Predicated region
      $region37: #{tpu_custom_call.1} parent=5 // pred_check
        %p233 = pneg %p232
      $region38: #{tpu_custom_call.1} parent=5 // pred_check_branch
        %235 = sbr.rel (%p233) target = $region40
      $region39: #{tpu_custom_call.1} parent=5 // pred_region
        // Predicated region
        $region41: #{tpu_custom_call.1} parent=39 // pred_check
          %p236 = pneg %p41
        $region42: #{tpu_custom_call.1} parent=39 // pred_check_branch
          %238 = sbr.rel (%p236) target = $region44
        $region43: #{tpu_custom_call.1} parent=39 // pred_region
          %s239 = sand.u32 %s31, 1
          %s240 = scalar_lea.sflag [#allocation4], %s239
          %s241 = sand.u32 %s31, 1
          %s242 = smul.addr %s241, 32
          %s243 = scalar_lea.vmem [#allocation3], %s242
          %s244 = smul.u32 2, %s21
          %s246 = ssub.s32 512, 512
          %247 = vsyncadd %s240, %s246
          %s248 = smul.addr %s244, 128
          %s249 = scalar_lea.hbm %s0, %s248
          %s250 = sshll.u32 %s243, 4
          %s251 = int_to_ptr.vmem [resolvable:$true] %s250
          %256 = dma.hbm_to_vmem [thread:$0]  %s249, 512, %s251, %s240, 512, 256, 16
        $region44: #{tpu_custom_call.1} parent=39 // pred_fallthru
          _
      $region40: #{tpu_custom_call.1} parent=5 // pred_fallthru
        _
      %p257 = scmp.le.s32.totalorder 1, %s21
      %p258 = scmp.lt.s32.totalorder %s21, 3
      %p259 = pnand %p257, %p258
      %p260 = pneg %p259
      // Predicated region
      $region45: #{tpu_custom_call.1} parent=5 // pred_check
        _
      $region46: #{tpu_custom_call.1} parent=5 // pred_check_branch
        %262 = sbr.rel (%p259) target = $region48
      $region47: #{tpu_custom_call.1} parent=5 // pred_region
        %s263 = ssub.s32 %s21, 1
        %s264 = sand.u32 %s34, 1
        %s265 = scalar_lea.sflag [#allocation4], %s264
        %s266 = sand.u32 %s34, 1
        %s267 = smul.addr %s266, 32
        %s268 = scalar_lea.vmem [#allocation3], %s267
        // Predicated region
        $region49: #{tpu_custom_call.1} parent=47 // pred_check
          %p269 = pneg %p47
        $region50: #{tpu_custom_call.1} parent=47 // pred_check_branch
          %271 = sbr.rel (%p269) target = $region52
        $region51: #{tpu_custom_call.1} parent=47 // pred_region
          %272 = dma.done %s265, 512
        $region52: #{tpu_custom_call.1} parent=47 // pred_fallthru
          _
        %s273 = sand.u32 %s34, 1
        %s274 = scalar_lea.sflag [#allocation4], %s273
        %s275 = sand.u32 %s34, 1
        %s276 = smul.addr %s275, 32
        %s277 = scalar_lea.vmem [#allocation3], %s276
        %p278 = pneg %p47
        %p279 = pneg %p44
        %p280 = pneg %p68
        %p281 = pneg %p65
        %p282 = pneg %p89
        %p283 = pneg %p86
        %p284 = pneg %p110
        %p285 = pneg %p107
        %p286 = pneg %p131
        %p287 = pneg %p128
        %p288 = pneg %p152
        %p289 = pneg %p149
        %p290 = pneg %p173
        %p291 = pneg %p170
        %p292 = pneg %p199
        %p293 = pneg %p196
        %s294 = sand.u32 %s186, 1
        %s295 = scalar_lea.sflag [#allocation5], %s294
        %s296 = sand.u32 %s186, 1
        %s297 = smul.addr %s296, 2
        %s298 = scalar_lea.vmem [#allocation6], %s297
        %s299 = smul.u32 2, %s26
        %s300 = smul.u32 2, %s26
        %v301 = vld [vmem:[%s268] sm:$0xff]
        %v302 = vld [vmem:[%s268 + $0x8] sm:$0xff]
        %v303 = vld [vmem:[%s268 + $0x10] sm:$0x3]
        %v304 = vld [vmem:[%s268 + $0x18] sm:$0x3]
        %v305 = vld [vmem:[%s1] sm:$0x7f]
        %v306 = vld [vmem:[%s2] sm:$0x7f]
        %308 = vset.pattern.permute.xlu0 0
        %309 = vperm.xlu0 %308, %v306
        %v310 = vpop.permute.xlu0 %309
        %vm312 = vcmask 80896
        %v314 = vsel %vm312, %v305, 0
        %vm316 = vcmask 1041408
        %v318 = vsel %vm316, %v303, 0
        %v321 = vsel %vm316, %v304, 0
        %323 = vmatprep.subr.mxu0 0.0
        %324 = vmatpush1.msra.mxu0 0.0
        %325 = vmatprep.subr.mxu0 0.0
        %326 = vmatpush1.msra.mxu0 0.0
        %327 = vmatprep.subr.mxu0 0.0
        %328 = vmatpush1.msra.mxu0 0.0
        %329 = vmatprep.subr.mxu0 0.0
        %330 = vmatpush1.msra.mxu0 0.0
        %331 = vmatprep.subr.mxu0 0.0
        %332 = vmatpush1.msra.mxu0 0.0
        %333 = vmatprep.subr.mxu0 0.0
        %334 = vmatpush1.msra.mxu0 0.0
        %335 = vmatprep.subr.mxu0 0.0
        %336 = vmatpush1.msra.mxu0 0.0
        %337 = vmatprep.subr.mxu0 0.0
        %338 = vmatpush1.msra.mxu0 0.0
        %339 = vmatprep.subr.mxu0 0.0
        %340 = vmatpush1.msra.mxu0 0.0
        %341 = vmatprep.subr.mxu0 0.0
        %342 = vmatpush1.msra.mxu0 0.0
        %343 = vmatprep.subr.mxu0 0.0
        %344 = vmatpush1.msra.mxu0 0.0
        %345 = vmatprep.subr.mxu0 0.0
        %346 = vmatpush1.msra.mxu0 0.0
        %347 = vmatprep.subr.mxu0 0.0
        %348 = vmatpush1.msra.mxu0 0.0
        %349 = vmatprep.subr.mxu0 0.0
        %350 = vmatpush1.msra.mxu0 0.0
        %351 = vmatprep.subr.mxu0 %v321
        %352 = vmatpush1.msra.mxu0 %v318
        %353 = vmatprep.subr.mxu0 %v302
        %354 = vmatpush1.msra.mxu0 %v301
        %355 = vmatprep.subr.mxu0 0.0
        %356 = vmatpush2.msra.mxu0 0.0
        %357 = vmatprep.subr.mxu0 0.0
        %358 = vmatpush2.msra.mxu0 0.0
        %359 = vmatprep.subr.mxu0 0.0
        %360 = vmatpush2.msra.mxu0 0.0
        %361 = vmatprep.subr.mxu0 0.0
        %362 = vmatpush2.msra.mxu0 0.0
        %363 = vmatprep.subr.mxu0 0.0
        %364 = vmatpush2.msra.mxu0 0.0
        %365 = vmatprep.subr.mxu0 0.0
        %366 = vmatpush2.msra.mxu0 0.0
        %367 = vmatprep.subr.mxu0 0.0
        %368 = vmatpush2.msra.mxu0 0.0
        %369 = vmatprep.subr.mxu0 0.0
        %370 = vmatpush2.msra.mxu0 0.0
        %371 = vmatprep.subr.mxu0 0.0
        %372 = vmatpush2.msra.mxu0 0.0
        %373 = vmatprep.subr.mxu0 0.0
        %374 = vmatpush2.msra.mxu0 0.0
        %375 = vmatprep.subr.mxu0 0.0
        %376 = vmatpush2.msra.mxu0 0.0
        %377 = vmatprep.subr.mxu0 0.0
        %378 = vmatpush2.msra.mxu0 0.0
        %379 = vmatprep.subr.mxu0 0.0
        %380 = vmatpush2.msra.mxu0 0.0
        %381 = vmatprep.subr.mxu0 0.0
        %382 = vmatpush2.msra.mxu0 0.0
        %383 = vmatprep.subr.mxu0 0.0
        %384 = vmatpush2.msra.mxu0 0.0
        %385 = vmatprep.subr.mxu0 0.0
        %386 = vmatpush2.msra.mxu0 0.0
        %387 = vmatprep.mubr.f32.mxu0 0.0
        %388 = vmatmul.mubr.f32.gmra.mxu0 %v314
        %v389 = vpop.f32.mrf.mxu0
        %v390 = vadd.f32 %v310, %v389
        %v391 = vpop.f32.mrf.mxu0
        %v392 = vadd.f32 %v310, %v391
        %393 = vdwg.mxu0
        %v394 = vmax.f32 %v390, 0.0
        %v395 = vmax.f32 %v392, 0.0
        %v396 = vld [vmem:[%s3] sm:$0x7f]
        %v397 = vld [vmem:[%s4] sm:$0x7f]
        %399 = vset.pattern.permute.xlu0 0
        %400 = vperm.xlu0 %399, %v397
        %v401 = vpop.permute.xlu0 %400
        %vm403 = vcmask 56320
        %v405 = vsel %vm403, %v396, 0
        %vm407 = vcmask 1046528
        %v409 = vsel %vm407, %v394, 0
        %v412 = vsel %vm407, %v395, 0
        %414 = vmatprep.subr.mxu0 0.0
        %415 = vmatpush1.msra.mxu0 0.0
        %416 = vmatprep.subr.mxu0 0.0
        %417 = vmatpush1.msra.mxu0 0.0
        %418 = vmatprep.subr.mxu0 0.0
        %419 = vmatpush1.msra.mxu0 0.0
        %420 = vmatprep.subr.mxu0 0.0
        %421 = vmatpush1.msra.mxu0 0.0
        %422 = vmatprep.subr.mxu0 0.0
        %423 = vmatpush1.msra.mxu0 0.0
        %424 = vmatprep.subr.mxu0 0.0
        %425 = vmatpush1.msra.mxu0 0.0
        %426 = vmatprep.subr.mxu0 0.0
        %427 = vmatpush1.msra.mxu0 0.0
        %428 = vmatprep.subr.mxu0 0.0
        %429 = vmatpush1.msra.mxu0 0.0
        %430 = vmatprep.subr.mxu0 0.0
        %431 = vmatpush1.msra.mxu0 0.0
        %432 = vmatprep.subr.mxu0 0.0
        %433 = vmatpush1.msra.mxu0 0.0
        %434 = vmatprep.subr.mxu0 0.0
        %435 = vmatpush1.msra.mxu0 0.0
        %436 = vmatprep.subr.mxu0 0.0
        %437 = vmatpush1.msra.mxu0 0.0
        %438 = vmatprep.subr.mxu0 0.0
        %439 = vmatpush1.msra.mxu0 0.0
        %440 = vmatprep.subr.mxu0 0.0
        %441 = vmatpush1.msra.mxu0 0.0
        %442 = vmatprep.subr.mxu0 0.0
        %443 = vmatpush1.msra.mxu0 0.0
        %444 = vmatprep.subr.mxu0 %v412
        %445 = vmatpush1.msra.mxu0 %v409
        %446 = vmatprep.subr.mxu0 0.0
        %447 = vmatpush2.msra.mxu0 0.0
        %448 = vmatprep.subr.mxu0 0.0
        %449 = vmatpush2.msra.mxu0 0.0
        %450 = vmatprep.subr.mxu0 0.0
        %451 = vmatpush2.msra.mxu0 0.0
        %452 = vmatprep.subr.mxu0 0.0
        %453 = vmatpush2.msra.mxu0 0.0
        %454 = vmatprep.subr.mxu0 0.0
        %455 = vmatpush2.msra.mxu0 0.0
        %456 = vmatprep.subr.mxu0 0.0
        %457 = vmatpush2.msra.mxu0 0.0
        %458 = vmatprep.subr.mxu0 0.0
        %459 = vmatpush2.msra.mxu0 0.0
        %460 = vmatprep.subr.mxu0 0.0
        %461 = vmatpush2.msra.mxu0 0.0
        %462 = vmatprep.subr.mxu0 0.0
        %463 = vmatpush2.msra.mxu0 0.0
        %464 = vmatprep.subr.mxu0 0.0
        %465 = vmatpush2.msra.mxu0 0.0
        %466 = vmatprep.subr.mxu0 0.0
        %467 = vmatpush2.msra.mxu0 0.0
        %468 = vmatprep.subr.mxu0 0.0
        %469 = vmatpush2.msra.mxu0 0.0
        %470 = vmatprep.subr.mxu0 0.0
        %471 = vmatpush2.msra.mxu0 0.0
        %472 = vmatprep.subr.mxu0 0.0
        %473 = vmatpush2.msra.mxu0 0.0
        %474 = vmatprep.subr.mxu0 0.0
        %475 = vmatpush2.msra.mxu0 0.0
        %476 = vmatprep.subr.mxu0 0.0
        %477 = vmatpush2.msra.mxu0 0.0
        %478 = vmatprep.mubr.f32.mxu0 0.0
        %479 = vmatmul.mubr.f32.gmra.mxu0 %v405
        %v480 = vpop.f32.mrf.mxu0
        %v481 = vadd.f32 %v401, %v480
        %v482 = vpop.f32.mrf.mxu0
        %v483 = vadd.f32 %v401, %v482
        %484 = vdwg.mxu0
        %v485 = vmax.f32 %v481, 0.0
        %v486 = vmax.f32 %v483, 0.0
        %v487 = vld [vmem:[%s5] sm:$0x1]
        %v488 = vld [vmem:[#allocation2] sm:$0x1]
        %490 = vset.pattern.permute.xlu0 0
        %491 = vperm.xlu0 %490, %v488
        %v492 = vpop.permute.xlu0 %491
        %v494 = vlaneseq
        %v495 = vshrl.u32 %v494, 7
        %v496 = vsub.s32 0, %v495
        %v497 = vrot.slane %v492, %v496
        %v499 = vsel %vm403, %v487, 0
        %v502 = vsel %vm407, %v485, 0
        %v505 = vsel %vm407, %v486, 0
        %507 = vmatprep.subr.mxu0 0.0
        %508 = vmatpush1.msra.mxu0 0.0
        %509 = vmatprep.subr.mxu0 0.0
        %510 = vmatpush1.msra.mxu0 0.0
        %511 = vmatprep.subr.mxu0 0.0
        %512 = vmatpush1.msra.mxu0 0.0
        %513 = vmatprep.subr.mxu0 0.0
        %514 = vmatpush1.msra.mxu0 0.0
        %515 = vmatprep.subr.mxu0 0.0
        %516 = vmatpush1.msra.mxu0 0.0
        %517 = vmatprep.subr.mxu0 0.0
        %518 = vmatpush1.msra.mxu0 0.0
        %519 = vmatprep.subr.mxu0 0.0
        %520 = vmatpush1.msra.mxu0 0.0
        %521 = vmatprep.subr.mxu0 0.0
        %522 = vmatpush1.msra.mxu0 0.0
        %523 = vmatprep.subr.mxu0 0.0
        %524 = vmatpush1.msra.mxu0 0.0
        %525 = vmatprep.subr.mxu0 0.0
        %526 = vmatpush1.msra.mxu0 0.0
        %527 = vmatprep.subr.mxu0 0.0
        %528 = vmatpush1.msra.mxu0 0.0
        %529 = vmatprep.subr.mxu0 0.0
        %530 = vmatpush1.msra.mxu0 0.0
        %531 = vmatprep.subr.mxu0 0.0
        %532 = vmatpush1.msra.mxu0 0.0
        %533 = vmatprep.subr.mxu0 0.0
        %534 = vmatpush1.msra.mxu0 0.0
        %535 = vmatprep.subr.mxu0 0.0
        %536 = vmatpush1.msra.mxu0 0.0
        %537 = vmatprep.subr.mxu0 %v505
        %538 = vmatpush1.msra.mxu0 %v502
        %539 = vmatprep.subr.mxu0 0.0
        %540 = vmatpush2.msra.mxu0 0.0
        %541 = vmatprep.subr.mxu0 0.0
        %542 = vmatpush2.msra.mxu0 0.0
        %543 = vmatprep.subr.mxu0 0.0
        %544 = vmatpush2.msra.mxu0 0.0
        %545 = vmatprep.subr.mxu0 0.0
        %546 = vmatpush2.msra.mxu0 0.0
        %547 = vmatprep.subr.mxu0 0.0
        %548 = vmatpush2.msra.mxu0 0.0
        %549 = vmatprep.subr.mxu0 0.0
        %550 = vmatpush2.msra.mxu0 0.0
        %551 = vmatprep.subr.mxu0 0.0
        %552 = vmatpush2.msra.mxu0 0.0
        %553 = vmatprep.subr.mxu0 0.0
        %554 = vmatpush2.msra.mxu0 0.0
        %555 = vmatprep.subr.mxu0 0.0
        %556 = vmatpush2.msra.mxu0 0.0
        %557 = vmatprep.subr.mxu0 0.0
        %558 = vmatpush2.msra.mxu0 0.0
        %559 = vmatprep.subr.mxu0 0.0
        %560 = vmatpush2.msra.mxu0 0.0
        %561 = vmatprep.subr.mxu0 0.0
        %562 = vmatpush2.msra.mxu0 0.0
        %563 = vmatprep.subr.mxu0 0.0
        %564 = vmatpush2.msra.mxu0 0.0
        %565 = vmatprep.subr.mxu0 0.0
        %566 = vmatpush2.msra.mxu0 0.0
        %567 = vmatprep.subr.mxu0 0.0
        %568 = vmatpush2.msra.mxu0 0.0
        %569 = vmatprep.subr.mxu0 0.0
        %570 = vmatpush2.msra.mxu0 0.0
        %571 = vmatprep.mubr.f32.mxu0 0.0
        %572 = vmatmul.mubr.f32.gmra.mxu0 %v499
        %v573 = vpop.f32.mrf.mxu0
        %v574 = vadd.f32 %v497, %v573
        %v575 = vpop.f32.mrf.mxu0
        %v576 = vadd.f32 %v497, %v575
        %577 = vdwg.mxu0
        %v580 = vcombine.low %v574, %v576
        %v582 = vunpack.c.l.s4 1966171168
        %v583 = vunpack.c.0.s8 %v582
        %v584 = vlaneseq
        %v585 = vshrl.u32 %v584, 7
        %v586 = vsub.s32 %v583, %v585
        %v587 = vrot.slane %v580, %v586
        %v589 = vunpack.c.l.s4 1966171168
        %v590 = vunpack.c.0.s8 %v589
        %v591 = vlaneseq
        %v592 = vshrl.u32 %v591, 7
        %v593 = vsub.s32 %v590, %v592
        %v594 = vrot.slane %v587, %v593
        %v596 = vlaneseq
        %vm597 = vcmp.ge.s32.totalorder %v596, 0
        %vm598 = vcmp.lt.s32.totalorder %v596, 256
        %vm599 = vmand %vm597, %vm598
        %600 = vst.msk [vmem:[%s298] sm:$0x3] %vm599, %v594
        %s601 = sand.u32 %s186, 1
        %s602 = scalar_lea.sflag [#allocation5], %s601
        %s603 = sand.u32 %s186, 1
        %s604 = smul.addr %s603, 2
        %s605 = scalar_lea.vmem [#allocation6], %s604
        // Predicated region
        $region53: #{tpu_custom_call.1} parent=47 // pred_check
          %p606 = pneg %p196
        $region54: #{tpu_custom_call.1} parent=47 // pred_check_branch
          %608 = sbr.rel (%p606) target = $region56
        $region55: #{tpu_custom_call.1} parent=47 // pred_region
          %s609 = smul.u32 2, %s26
          %s611 = ssub.s32 32, 32
          %612 = vsyncadd %s602, %s611
          %s613 = smul.addr %s609, 16
          %s614 = scalar_lea.hbm %s7, %s613
          %s616 = sshll.u32 %s605, 4
          %s617 = int_to_ptr.vmem [resolvable:$true] %s616
          %619 = dma.vmem_to_hbm [thread:$0]  %s617, 32, %s614, %s602
        $region56: #{tpu_custom_call.1} parent=47 // pred_fallthru
          _
      $region48: #{tpu_custom_call.1} parent=5 // pred_fallthru
        _
      %p620 = scmp.le.s32.totalorder 2, %s21
      // Predicated region
      $region57: #{tpu_custom_call.1} parent=5 // pred_check
        %p621 = pneg %p620
      $region58: #{tpu_custom_call.1} parent=5 // pred_check_branch
        %623 = sbr.rel (%p621) target = $region60
      $region59: #{tpu_custom_call.1} parent=5 // pred_region
        %s624 = ssub.s32 %s21, 2
        // Predicated region
        $region61: #{tpu_custom_call.1} parent=59 // pred_check
          %p625 = pneg %p202
        $region62: #{tpu_custom_call.1} parent=59 // pred_check_branch
          %627 = sbr.rel (%p625) target = $region64
        $region63: #{tpu_custom_call.1} parent=59 // pred_region
          %s628 = sand.u32 %s187, 1
          %s629 = scalar_lea.sflag [#allocation5], %s628
          %s630 = sand.u32 %s187, 1
          %s631 = smul.addr %s630, 2
          %s632 = scalar_lea.vmem [#allocation6], %s631
          %633 = dma.done %s629, 32
        $region64: #{tpu_custom_call.1} parent=59 // pred_fallthru
          _
      $region60: #{tpu_custom_call.1} parent=5 // pred_fallthru
        _
    $region6: #{tpu_custom_call.1} parent=1 // loop_footer
      %s25 = sadd.s32 1, %s21
    $region7: #{tpu_custom_call.1} parent=1 // loop_footer_branch
      %20 = sbr.rel target = $region3
    $region8: #{tpu_custom_call.1} parent=1 // loop_exit
      _
    %634 = vsyncpa [#allocation4], 1
    %s635 = scalar_lea.sflag [#allocation4], 1
    %636 = vsyncpa %s635, 1
    %637 = vsyncpa [#allocation5], 1
    %s638 = scalar_lea.sflag [#allocation5], 1
    %639 = vsyncpa %s638, 1

</llo_original>
